<compile_context>
chip_gen: v7x
topology: tpu7x:2x2x1
jax: 0.10.0
libtpu: 0.0.40
codegen_flags: <defaults>
</compile_context>

<pallas_src>
import functools

import jax
import jax.numpy as jnp
from jax import lax
from jax.experimental import pallas as pl
from jax.experimental.pallas import tpu as pltpu


def _round_up(x, m):
    return ((x + m - 1) // m) * m


def _dice_kernel(logit_ref, mask_ref, loss_ref, num_acc, den_acc, *,
                 smooth, p, l_total, tile_l, need_l_mask):
    # logit_ref / mask_ref: (tile_b, tile_l)   loss_ref: (tile_b, 1)
    # num_acc / den_acc:    (tile_b, 1) f32 VMEM scratch (persist across L tiles)
    l_idx = pl.program_id(1)

    @pl.when(l_idx == 0)
    def _():
        num_acc[...] = jnp.zeros_like(num_acc)
        den_acc[...] = jnp.zeros_like(den_acc)

    pred = jax.nn.sigmoid(logit_ref[...].astype(jnp.float32))   # EUP
    target = mask_ref[...].astype(jnp.float32)                  # VPU

    num_part = pred * target
    if p == 1:
        den_part = pred + target
    elif p == 2:
        den_part = pred * pred + target * target
    else:
        den_part = jnp.power(pred, p) + jnp.power(target, p)

    if need_l_mask:
        # Only the trailing partially-filled feature tile has out-of-range
        # lanes (block padding is unspecified).  Select (not multiply) so even
        # NaN/inf garbage contributes exactly zero.
        col = lax.broadcasted_iota(jnp.int32, num_part.shape, 1)
        valid = (l_idx * tile_l + col) < l_total
        num_part = jnp.where(valid, num_part, 0.0)
        den_part = jnp.where(valid, den_part, 0.0)

    num_acc[...] += jnp.sum(num_part, axis=-1, keepdims=True)   # XLU
    den_acc[...] += jnp.sum(den_part, axis=-1, keepdims=True)

    @pl.when(l_idx == pl.num_programs(1) - 1)
    def _():
        num = num_acc[...] + jnp.float32(smooth)
        den = den_acc[...] + jnp.float32(smooth)
        loss_ref[...] = 1.0 - num / den


def dice_loss(ref_logit, mask, *, smooth=1.0, p=2, reduction="mean"):
    """Pallas equivalent of DiceLoss.forward."""
    b = ref_logit.shape[0]
    logit2d = ref_logit.reshape(b, -1)
    mask2d = mask.reshape(b, -1)
    l = logit2d.shape[1]

    # Batch tile: use the full batch when small (block dim == array dim is
    # always a legal block shape); otherwise 8-aligned 64-row tiles (a partial
    # trailing tile is fine: garbage rows are independent and their OOB output
    # writes are dropped).
    tile_b = b if b <= 64 else 64
    # Feature tile: lane-dense multiple of 128, capped so one block is ~2 MiB
    # f32 (double-buffered 2 inputs ~8 MiB total -> fits every chip).
    max_block_elems = 512 * 1024
    tile_l_cap = max(128, (max_block_elems // tile_b) // 128 * 128)
    tile_l = min(_round_up(l, 128), tile_l_cap)

    grid = (pl.cdiv(b, tile_b), pl.cdiv(l, tile_l))
    need_l_mask = (grid[1] * tile_l) != l

    kernel = functools.partial(
        _dice_kernel, smooth=float(smooth), p=p,
        l_total=l, tile_l=tile_l, need_l_mask=need_l_mask)

    per_row = pl.pallas_call(
        kernel,
        out_shape=jax.ShapeDtypeStruct((b, 1), jnp.float32),
        grid_spec=pltpu.PrefetchScalarGridSpec(
            num_scalar_prefetch=0,
            grid=grid,
            in_specs=[
                pl.BlockSpec((tile_b, tile_l), lambda i, k: (i, k)),
                pl.BlockSpec((tile_b, tile_l), lambda i, k: (i, k)),
            ],
            out_specs=pl.BlockSpec((tile_b, 1), lambda i, k: (i, 0)),
            scratch_shapes=[
                pltpu.VMEM((tile_b, 1), jnp.float32),
                pltpu.VMEM((tile_b, 1), jnp.float32),
            ],
        ),
        compiler_params=pltpu.CompilerParams(
            dimension_semantics=("parallel", "arbitrary"),
            vmem_limit_bytes=32 * 1024 * 1024,
        ),
    )(logit2d, mask2d)

    loss = per_row[:, 0]
    if reduction == "mean":
        return jnp.mean(loss)
    elif reduction == "sum":
        return jnp.sum(loss)
    elif reduction == "none":
        return loss
    else:
        raise Exception("Unexpected reduction {}".format(reduction))


class DiceLoss:
    """Mirror of the PyTorch module. `weight` is a stored loss-combination
    scalar and is NOT used inside the forward (matches the reference)."""

    def __init__(self, weight, smooth=1, p=2, reduction="mean"):
        self.weight = weight
        self.smooth = smooth
        self.p = p
        self.reduction = reduction

    def __call__(self, input):
        return dice_loss(
            input["ref_logit"],
            input["mask"],
            smooth=self.smooth,
            p=self.p,
            reduction=self.reduction,
        )


if __name__ == "__main__":
    # small, deterministic example: batch B=2, spatial 16x16
    key = jax.random.PRNGKey(0)
    k_logit, k_mask = jax.random.split(key)
    B, H, W = 2, 16, 16
    ref_logit = jax.random.normal(k_logit, (B, H, W), dtype=jnp.float32)
    gt_mask = (jax.random.uniform(k_mask, (B, H, W)) > 0.5).astype(jnp.float32)

    module = DiceLoss(weight=1.0)  # deterministic "parameter" init (unused in fwd)
    loss = module({"ref_logit": ref_logit, "mask": gt_mask})
    loss = jax.block_until_ready(loss)

    # pure-JAX reference check
    pred = jax.nn.sigmoid(ref_logit).reshape(B, -1)
    tgt = gt_mask.reshape(B, -1)
    num = jnp.sum(pred * tgt, axis=1) + 1.0
    den = jnp.sum(pred * pred + tgt * tgt, axis=1) + 1.0
    ref = jnp.mean(1.0 - num / den)
    assert jnp.allclose(loss, ref, atol=1e-5, rtol=1e-5), (loss, ref)

    print("KERNEL_OK")
</pallas_src>

<mosaic_0001>
module attributes {stable_mosaic.version = 11 : i64} {
  func.func @_dice_kernel(%arg0: i32, %arg1: i32, %arg2: memref<2x256xf32, #tpu.memory_space<vmem>>, %arg3: memref<2x256xf32, #tpu.memory_space<vmem>>, %arg4: memref<2x1xf32, #tpu.memory_space<vmem>>, %arg5: memref<2x1xf32, #tpu.memory_space<vmem>>, %arg6: memref<2x1xf32, #tpu.memory_space<vmem>>) attributes {dimension_semantics = [#tpu.dimension_semantics<parallel>, #tpu.dimension_semantics<arbitrary>], iteration_bounds = array<i64: 1, 1>, scalar_prefetch = 0 : i64, scratch_operands = 2 : i64, tpu.core_type = #tpu.core_type<tc>, window_params = [{transform_indices = @transform_0, window_bounds = array<i64: 2, 256>}, {transform_indices = @transform_1, window_bounds = array<i64: 2, 256>}, {transform_indices = @transform_2, window_bounds = array<i64: 2, 1>}]} {
    %c0_i32 = arith.constant 0 : i32
    %0 = arith.cmpi eq, %arg1, %c0_i32 : i32
    %1 = arith.extui %0 : i1 to i32
    %c0_i32_0 = arith.constant 0 : i32
    %2 = arith.cmpi ne, %1, %c0_i32_0 : i32
    scf.if %2 {
      %cst_16 = arith.constant 0.000000e+00 : f32
      %27 = vector.broadcast %cst_16 : f32 to vector<2x1xf32>
      %c0_17 = arith.constant 0 : index
      %c0_18 = arith.constant 0 : index
      %28 = vector.load %arg5[%c0_17, %c0_18] : memref<2x1xf32, #tpu.memory_space<vmem>>, vector<2x1xf32>
      tpu.vector_store %arg5[%c0_17, %c0_18], %27 {strides = array<i32>} : memref<2x1xf32, #tpu.memory_space<vmem>>, vector<2x1xf32>,
      %cst_19 = arith.constant 0.000000e+00 : f32
      %29 = vector.broadcast %cst_19 : f32 to vector<2x1xf32>
      %c0_20 = arith.constant 0 : index
      %c0_21 = arith.constant 0 : index
      %30 = vector.load %arg6[%c0_20, %c0_21] : memref<2x1xf32, #tpu.memory_space<vmem>>, vector<2x1xf32>
      tpu.vector_store %arg6[%c0_20, %c0_21], %29 {strides = array<i32>} : memref<2x1xf32, #tpu.memory_space<vmem>>, vector<2x1xf32>,
    } else {
    }
    %c0 = arith.constant 0 : index
    %c0_1 = arith.constant 0 : index
    %3 = vector.load %arg2[%c0, %c0_1] : memref<2x256xf32, #tpu.memory_space<vmem>>, vector<2x256xf32>
    %4 = arith.negf %3 : vector<2x256xf32>
    %5 = math.exp %4 : vector<2x256xf32>
    %cst = arith.constant 1.000000e+00 : f32
    %6 = vector.broadcast %cst : f32 to vector<2x256xf32>
    %7 = arith.addf %6, %5 : vector<2x256xf32>
    %8 = arith.divf %6, %7 : vector<2x256xf32>
    %c0_2 = arith.constant 0 : index
    %c0_3 = arith.constant 0 : index
    %9 = vector.load %arg3[%c0_2, %c0_3] : memref<2x256xf32, #tpu.memory_space<vmem>>, vector<2x256xf32>
    %10 = arith.mulf %8, %9 : vector<2x256xf32>
    %11 = arith.mulf %8, %8 : vector<2x256xf32>
    %12 = arith.mulf %9, %9 : vector<2x256xf32>
    %13 = arith.addf %11, %12 : vector<2x256xf32>
    %c0_4 = arith.constant 0 : index
    %c0_5 = arith.constant 0 : index
    %14 = vector.load %arg5[%c0_4, %c0_5] : memref<2x1xf32, #tpu.memory_space<vmem>>, vector<2x1xf32>
    %cst_6 = arith.constant dense<0.000000e+00> : vector<2xf32>
    %15 = vector.multi_reduction <add>, %10, %cst_6 [1] : vector<2x256xf32> to vector<2xf32>
    %16 = vector.shape_cast %15 : vector<2xf32> to vector<2x1xf32>
    %17 = arith.addf %14, %16 : vector<2x1xf32>
    %c0_7 = arith.constant 0 : index
    %c0_8 = arith.constant 0 : index
    %18 = vector.load %arg5[%c0_7, %c0_8] : memref<2x1xf32, #tpu.memory_space<vmem>>, vector<2x1xf32>
    tpu.vector_store %arg5[%c0_7, %c0_8], %17 {strides = array<i32>} : memref<2x1xf32, #tpu.memory_space<vmem>>, vector<2x1xf32>,
    %c0_9 = arith.constant 0 : index
    %c0_10 = arith.constant 0 : index
    %19 = vector.load %arg6[%c0_9, %c0_10] : memref<2x1xf32, #tpu.memory_space<vmem>>, vector<2x1xf32>
    %cst_11 = arith.constant dense<0.000000e+00> : vector<2xf32>
    %20 = vector.multi_reduction <add>, %13, %cst_11 [1] : vector<2x256xf32> to vector<2xf32>
    %21 = vector.shape_cast %20 : vector<2xf32> to vector<2x1xf32>
    %22 = arith.addf %19, %21 : vector<2x1xf32>
    %c0_12 = arith.constant 0 : index
    %c0_13 = arith.constant 0 : index
    %23 = vector.load %arg6[%c0_12, %c0_13] : memref<2x1xf32, #tpu.memory_space<vmem>>, vector<2x1xf32>
    tpu.vector_store %arg6[%c0_12, %c0_13], %22 {strides = array<i32>} : memref<2x1xf32, #tpu.memory_space<vmem>>, vector<2x1xf32>,
    %c0_i32_14 = arith.constant 0 : i32
    %24 = arith.cmpi eq, %arg1, %c0_i32_14 : i32
    %25 = arith.extui %24 : i1 to i32
    %c0_i32_15 = arith.constant 0 : i32
    %26 = arith.cmpi ne, %25, %c0_i32_15 : i32
    scf.if %26 {
      %c0_16 = arith.constant 0 : index
      %c0_17 = arith.constant 0 : index
      %27 = vector.load %arg5[%c0_16, %c0_17] : memref<2x1xf32, #tpu.memory_space<vmem>>, vector<2x1xf32>
      %cst_18 = arith.constant 1.000000e+00 : f32
      %28 = vector.broadcast %cst_18 : f32 to vector<2x1xf32>
      %29 = arith.addf %27, %28 : vector<2x1xf32>
      %c0_19 = arith.constant 0 : index
      %c0_20 = arith.constant 0 : index
      %30 = vector.load %arg6[%c0_19, %c0_20] : memref<2x1xf32, #tpu.memory_space<vmem>>, vector<2x1xf32>
      %cst_21 = arith.constant 1.000000e+00 : f32
      %31 = vector.broadcast %cst_21 : f32 to vector<2x1xf32>
      %32 = arith.addf %30, %31 : vector<2x1xf32>
      %33 = arith.divf %29, %32 : vector<2x1xf32>
      %cst_22 = arith.constant 1.000000e+00 : f32
      %34 = vector.broadcast %cst_22 : f32 to vector<2x1xf32>
      %35 = arith.subf %34, %33 : vector<2x1xf32>
      %c0_23 = arith.constant 0 : index
      %c0_24 = arith.constant 0 : index
      %36 = vector.load %arg4[%c0_23, %c0_24] : memref<2x1xf32, #tpu.memory_space<vmem>>, vector<2x1xf32>
      tpu.vector_store %arg4[%c0_23, %c0_24], %35 {strides = array<i32>} : memref<2x1xf32, #tpu.memory_space<vmem>>, vector<2x1xf32>,
    } else {
    }
    return
  }
  func.func @transform_0(%arg0: i32, %arg1: i32) -> (i32, i32) {
    %c0_i32 = arith.constant 0 : i32
    return %arg0, %arg1 : i32, i32
  }
  func.func @transform_1(%arg0: i32, %arg1: i32) -> (i32, i32) {
    %c0_i32 = arith.constant 0 : i32
    return %arg0, %arg1 : i32, i32
  }
  func.func @transform_2(%arg0: i32, %arg1: i32) -> (i32, i32) {
    %c0_i32 = arith.constant 0 : i32
    %c0_i32_0 = arith.constant 0 : i32
    return %arg0, %c0_i32 : i32, i32
  }
}

</mosaic_0001>

<llo_original>
// kernel: tpu_custom_call.1
$region0: #{tpu_custom_call.1}
  #allocation0 [shape = 'u32[]', space=smem, size = 0x4, offset = 0x4, fixed_abs, tag = 'smem constant byte address 0x4 - core index']
  #allocation1 [shape = 'u32[144,128]{1,0:T(1,128)}', space=vmem, size = 0x12000, scoped, tag = 'internal scratch']
  #allocation2 [shape = 'f32[2,1]{1,0:T(2,128)}', space=vmem, size = 0x400, scoped, tag = 'scratch operand']
  #allocation3 [shape = 'f32[2,1]{1,0:T(2,128)}', space=vmem, size = 0x400, scoped, tag = 'scratch operand']
  %s0 = inlined_call_operand.hbm [shape: f32[2,256], index: 0, kind: input, shape index: {}]
  %s1 = inlined_call_operand.hbm [shape: f32[2,256], index: 1, kind: input, shape index: {}]
  %s2 = inlined_call_operand.vmem [shape: f32[2,1], index: 2, kind: output, shape index: {}]
  %s3 = sld [smem:[#allocation0]]
  $region34: #{tpu_custom_call.1} parent=0
    _
  %s5 = ssub.s32 1, %s3
  %s6 = scalar_select 0, %s5, %s3
  $region1: #{tpu_custom_call.1} parent=0
    #allocation4 [shape = 'u8[2048]{0}', space=vmem, size = 0x800, scoped, tag = 'input window, operand 0, single buffered']
    #allocation5 [shape = 's32[1]{0}', space=sflag, size = 0x4, scoped, tag = 'scoped memory for tpu_custom_call.1']
    #allocation6 [shape = 'u8[2048]{0}', space=vmem, size = 0x800, scoped, tag = 'input window, operand 1, single buffered']
    #allocation7 [shape = 's32[1]{0}', space=sflag, size = 0x4, scoped, tag = 'scoped memory for tpu_custom_call.1']
    %7 = vsyncpa [#allocation5], 0
    %8 = vsyncpa [#allocation7], 0
    // Predicated region
    $region2: #{tpu_custom_call.1} parent=1 // pred_check
      _
    $region3: #{tpu_custom_call.1} parent=1 // pred_check_branch
      %10 = sbr.rel (0) target = $region5
    $region4: #{tpu_custom_call.1} parent=1 // pred_region
      %s12 = ssub.s32 64, 64
      %13 = vsyncadd [#allocation5], %s12
      %s15 = sshll.u32 [#allocation4], 4
      %s16 = int_to_ptr.vmem [resolvable:$true] %s15
      %18 = dma.hbm_to_vmem [thread:$0]  %s0, 64, %s16, [#allocation5]
    $region5: #{tpu_custom_call.1} parent=1 // pred_fallthru
      _
    // Predicated region
    $region6: #{tpu_custom_call.1} parent=1 // pred_check
      _
    $region7: #{tpu_custom_call.1} parent=1 // pred_check_branch
      %20 = sbr.rel (0) target = $region9
    $region8: #{tpu_custom_call.1} parent=1 // pred_region
      %s22 = ssub.s32 64, 64
      %23 = vsyncadd [#allocation7], %s22
      %s25 = sshll.u32 [#allocation6], 4
      %s26 = int_to_ptr.vmem [resolvable:$true] %s25
      %28 = dma.hbm_to_vmem [thread:$0]  %s1, 64, %s26, [#allocation7]
    $region9: #{tpu_custom_call.1} parent=1 // pred_fallthru
      _
    // Predicated region
    $region10: #{tpu_custom_call.1} parent=1 // pred_check
      _
    $region11: #{tpu_custom_call.1} parent=1 // pred_check_branch
      %30 = sbr.rel (0) target = $region13
    $region12: #{tpu_custom_call.1} parent=1 // pred_region
      %31 = dma.done [#allocation5], 64
    $region13: #{tpu_custom_call.1} parent=1 // pred_fallthru
      _
    // Predicated region
    $region14: #{tpu_custom_call.1} parent=1 // pred_check
      _
    $region15: #{tpu_custom_call.1} parent=1 // pred_check_branch
      %33 = sbr.rel (0) target = $region17
    $region16: #{tpu_custom_call.1} parent=1 // pred_region
      %34 = dma.done [#allocation7], 64
    $region17: #{tpu_custom_call.1} parent=1 // pred_fallthru
      _
    %p35 = scmp.eq.s32.totalorder 0, 0
    // Predicated region
    $region18: #{tpu_custom_call.1} parent=1 // pred_check
      %p36 = pneg %p35
    $region19: #{tpu_custom_call.1} parent=1 // pred_check_branch
      %38 = sbr.rel (%p36) target = $region21
    $region20: #{tpu_custom_call.1} parent=1 // pred_region
      %vm39 = vcmask 1024
      %40 = vst.msk [vmem:[#allocation2] sm:$0x3] %vm39, 0.0
      %41 = vst.msk [vmem:[#allocation3] sm:$0x3] %vm39, 0.0
    $region21: #{tpu_custom_call.1} parent=1 // pred_fallthru
      _
    %v42 = vld [vmem:[#allocation4] sm:$0xf]
    %v43 = vxor.u32 %v42, 2147483648
    %v44 = vmul.f32 %v43, 1.442695
    %v45 = vpow.pop %v44
    %v46 = vadd.f32 %v45, 1.0
    %v47 = vrcp.pop %v46
    %v48 = vmul.f32 1.0, %v47
    %v49 = vld [vmem:[#allocation6] sm:$0xf]
    %v50 = vmul.f32 %v48, %v49
    %v51 = vmul.f32 %v48, %v48
    %v52 = vmul.f32 %v49, %v49
    %v53 = vadd.f32 %v51, %v52
    %v54 = vld [vmem:[#allocation2] sm:$0x3]
    %v57 = vunpack.c.l.s4 1983009808
    %v58 = vunpack.c.0.s8 %v57
    %v59 = vlaneseq
    %v60 = vshrl.u32 %v59, 7
    %v61 = vsub.s32 %v58, %v60
    %v62 = vrot.slane %v50, %v61
    %v63 = vcombine.high %v62, %v62
    %vm66 = vcmask 1041408
    %v67 = vsel %vm66, %v62, 0.0
    %v68 = vsel %vm66, %v63, 0.0
    %v69 = vadd.f32 %v67, %v68
    %70 = vadd.xlane.f32.xlu0 %v69
    %v71 = vpop.xlane.xlu0 %70
    %v72 = vadd.f32 %v54, %v71
    %vm73 = vcmask 1024
    %74 = vst.msk [vmem:[#allocation2] sm:$0x3] %vm73, %v72
    %v75 = vld [vmem:[#allocation3] sm:$0x3]
    %v78 = vunpack.c.l.s4 1983009808
    %v79 = vunpack.c.0.s8 %v78
    %v80 = vlaneseq
    %v81 = vshrl.u32 %v80, 7
    %v82 = vsub.s32 %v79, %v81
    %v83 = vrot.slane %v53, %v82
    %v84 = vcombine.high %v83, %v83
    %v87 = vsel %vm66, %v83, 0.0
    %v88 = vsel %vm66, %v84, 0.0
    %v89 = vadd.f32 %v87, %v88
    %90 = vadd.xlane.f32.xlu0 %v89
    %v91 = vpop.xlane.xlu0 %90
    %v92 = vadd.f32 %v75, %v91
    %93 = vst.msk [vmem:[#allocation3] sm:$0x3] %vm73, %v92
    // Predicated region
    $region22: #{tpu_custom_call.1} parent=1 // pred_check
      %p94 = pneg %p35
    $region23: #{tpu_custom_call.1} parent=1 // pred_check_branch
      %96 = sbr.rel (%p94) target = $region25
    $region24: #{tpu_custom_call.1} parent=1 // pred_region
      %v97 = vld [vmem:[#allocation2] sm:$0x3]
      %v98 = vadd.f32 %v97, 1.0
      %v99 = vld [vmem:[#allocation3] sm:$0x3]
      %v100 = vadd.f32 %v99, 1.0
      %v101 = vrcp.pop %v100
      %v102 = vmul.f32 %v98, %v101
      %v103 = vsub.f32 1.0, %v102
      %104 = vst.msk [vmem:[%s2] sm:$0x3] %vm73, %v103
    $region25: #{tpu_custom_call.1} parent=1 // pred_fallthru
      _
    // Predicated region
    $region26: #{tpu_custom_call.1} parent=1 // pred_check
      _
    $region27: #{tpu_custom_call.1} parent=1 // pred_check_branch
      %106 = sbr.rel (0) target = $region29
    $region28: #{tpu_custom_call.1} parent=1 // pred_region
      _
    $region29: #{tpu_custom_call.1} parent=1 // pred_fallthru
      _
    // Predicated region
    $region30: #{tpu_custom_call.1} parent=1 // pred_check
      _
    $region31: #{tpu_custom_call.1} parent=1 // pred_check_branch
      %108 = sbr.rel (0) target = $region33
    $region32: #{tpu_custom_call.1} parent=1 // pred_region
      _
    $region33: #{tpu_custom_call.1} parent=1 // pred_fallthru
      _
    %109 = vsyncpa [#allocation5], 1
    %110 = vsyncpa [#allocation7], 1

</llo_original>
